<compile_context>
chip_gen: v6e
topology: v6e:2x2x1
jax: 0.10.0
libtpu: 0.0.40
codegen_flags: <defaults>
</compile_context>

<pallas_src>
import jax
import jax.numpy as jnp
from jax.experimental import pallas as pl
from jax.experimental.pallas import tpu as pltpu


def _cdiv(a, b):
    return -(-a // b)


def _round_up(x, m):
    return _cdiv(x, m) * m


def _balanced_tiles(n, max_tile):
    """Pick a tile T for an axis of length n.

    Returns (T, n_padded) where either T == n_padded (single full-dim block) or
    T is a multiple of 8 and n_padded % T == 0 with minimal padding.
    """
    if n <= max_tile:
        return n, n
    t = _round_up(_cdiv(n, _cdiv(n, max_tile)), 8)
    return t, _round_up(n, t)


# ----------------------------------------------------------------------------
# Pallas kernel 1: GeneralFourier2d spectrum modulation (elementwise hot path)
# ----------------------------------------------------------------------------
def _spectrum_kernel(w1_ref, b1_ref, w2_ref, b2_ref, re_ref, im_ref,
                     ore_ref, oim_ref):
    # params: (TR, 128) slabs; data: (1, TR, 128) slabs. All lane-dense f32.
    # Parameter ReLUs stay in-kernel: VPU work hidden under HBM streaming.
    w1 = jnp.maximum(w1_ref[...], 0.0)
    b1 = jnp.maximum(b1_ref[...], 0.0)
    w2 = jnp.maximum(w2_ref[...], 0.0)
    b2 = jnp.maximum(b2_ref[...], 0.0)

    re = re_ref[0]
    im = im_ref[0]

    init_spectrum = jnp.sqrt(re * re + im * im)                       # |X|
    spectrum = w2 * jnp.maximum(w1 * init_spectrum + b1, 0.0) + b2    # log=False path
    scale = spectrum / (init_spectrum + 1e-16)                        # exact torch eps

    ore_ref[0] = re * scale
    oim_ref[0] = im * scale


def fourier_filter(x, W1, B1, W2, B2, *, tile_rows=1024):
    """GeneralFourier2d.forward (log=False). x: (N, C, H, W) float32."""
    N, C, H, W = x.shape
    F = W // 2 + 1
    L = C * H * F

    # torch.rfft(x, signal_ndim=3, normalized=True, onesided=True)
    rf = jnp.fft.rfftn(x, axes=(1, 2, 3), norm="ortho")      # (N, C, H, F) complex64
    re = jnp.real(rf).astype(jnp.float32).reshape(N, L)
    im = jnp.imag(rf).astype(jnp.float32).reshape(N, L)

    rows = _cdiv(L, 128)                       # lane-dense rows of 128
    TR, R = _balanced_tiles(rows, tile_rows)   # balanced tiles, minimal padding
    Lp = R * 128

    def data_slab(a):                          # (N, L) -> (N, R, 128), zero padded
        return jnp.pad(a, ((0, 0), (0, Lp - L))).reshape(N, R, 128)

    def par_slab(p):                           # (C, H, F) -> (R, 128), zero padded
        return jnp.pad(p.reshape(L), (0, Lp - L)).reshape(R, 128)

    re_s, im_s = data_slab(re), data_slab(im)
    w1_s, b1_s = par_slab(W1), par_slab(B1)
    w2_s, b2_s = par_slab(W2), par_slab(B2)

    par_spec = pl.BlockSpec((TR, 128), lambda r, n: (r, 0))      # constant over n
    dat_spec = pl.BlockSpec((1, TR, 128), lambda r, n: (n, r, 0))

    ore, oim = pl.pallas_call(
        _spectrum_kernel,
        out_shape=(jax.ShapeDtypeStruct((N, R, 128), jnp.float32),
                   jax.ShapeDtypeStruct((N, R, 128), jnp.float32)),
        # batch innermost: param blocks keep the same index -> no re-DMA per sample
        grid=(R // TR, N),
        in_specs=[par_spec, par_spec, par_spec, par_spec, dat_spec, dat_spec],
        out_specs=(dat_spec, dat_spec),
        compiler_params=pltpu.CompilerParams(
            dimension_semantics=("parallel", "parallel")),
    )(w1_s, b1_s, w2_s, b2_s, re_s, im_s)

    ore = ore.reshape(N, Lp)[:, :L].reshape(N, C, H, F)
    oim = oim.reshape(N, Lp)[:, :L].reshape(N, C, H, F)
    z = ore + 1j * oim
    # torch.irfft(..., signal_ndim=3, normalized=True, onesided=True,
    #             signal_sizes=x.shape[1:])
    y = jnp.fft.irfftn(z, s=(C, H, W), axes=(1, 2, 3), norm="ortho")
    return y.astype(jnp.float32)


# ----------------------------------------------------------------------------
# Pallas kernel 2: inner segmentation model (1x1 conv head, tiny-C VPU path)
# ----------------------------------------------------------------------------
def _pointwise_conv_kernel(w_ref, b_ref, x_ref, o_ref):
    # w_ref: (K, C) SMEM scalars, b_ref: (K,) SMEM, x_ref: (1, C, TS, 128) VMEM.
    # Tiny-C contraction as K*C broadcast VPU FMAs (no MXU fill/drain).
    # TODO(synk): for real-sized channel counts (C >= 128), switch to jnp.dot on
    #             the MXU with C padded/aligned to 128 and f32 accumulation.
    C = x_ref.shape[1]
    K = o_ref.shape[1]
    xs = [x_ref[0, c] for c in range(C)]          # each (TS, 128), lane-dense
    for k in range(K):
        acc = xs[0] * w_ref[k, 0] + b_ref[k]
        for c in range(1, C):
            acc = acc + xs[c] * w_ref[k, c]
        o_ref[0, k] = acc


def seg_head(x_nchw, conv_w, conv_b, *, tile_hw=32768):
    """1x1 Conv2d(C -> K) computed directly on NCHW, no layout transposes.

    x_nchw: (N, C, H, W); conv_w: (K, C); conv_b: (K,) -> (N, K, H, W).
    """
    N, C, H, W = x_nchw.shape
    K = conv_w.shape[0]
    HW = H * W

    S0 = _round_up(HW, 128) // 128                 # rows of 128 lanes
    TS, S = _balanced_tiles(S0, max(1, tile_hw // 128))
    HWp = S * 128

    x_hw = x_nchw.reshape(N, C, HW)                # contiguous reshape
    if HWp != HW:
        x_hw = jnp.pad(x_hw, ((0, 0), (0, 0), (0, HWp - HW)))
    x4 = x_hw.reshape(N, C, S, 128)                # lane/sublane-dense spatial slab

    out = pl.pallas_call(
        _pointwise_conv_kernel,
        out_shape=jax.ShapeDtypeStruct((N, K, S, 128), jnp.float32),
        grid=(N, S // TS),
        in_specs=[pl.BlockSpec(memory_space=pltpu.MemorySpace.SMEM),   # conv_w
                  pl.BlockSpec(memory_space=pltpu.MemorySpace.SMEM),   # conv_b
                  pl.BlockSpec((1, C, TS, 128), lambda n, t: (n, 0, t, 0))],
        out_specs=pl.BlockSpec((1, K, TS, 128), lambda n, t: (n, 0, t, 0)),
        compiler_params=pltpu.CompilerParams(
            dimension_semantics=("parallel", "parallel")),
    )(conv_w, conv_b, x4)

    return out.reshape(N, K, HWp)[:, :, :HW].reshape(N, K, H, W)


# ----------------------------------------------------------------------------
# FilterSegModel.forward
# ----------------------------------------------------------------------------
def filter_seg_model(x, params):
    x = fourier_filter(x, params["W1"], params["B1"], params["W2"], params["B2"])
    # TODO(synk): the wrapped `model` in FilterSegModel is arbitrary; here it is
    #             a 1x1-conv segmentation head (C -> num_classes).
    x = seg_head(x, params["conv_w"], params["conv_b"])
    return x


def init_params(c, h, w, num_classes, key):
    f = w // 2 + 1
    k_w, k_b = jax.random.split(key)
    return {
        # GeneralFourier2d.__init__: ones / zeros (deterministic)
        "W1": jnp.ones((c, h, f), jnp.float32),
        "B1": jnp.zeros((c, h, f), jnp.float32),
        "W2": jnp.ones((c, h, f), jnp.float32),
        "B2": jnp.zeros((c, h, f), jnp.float32),
        # inner model: 1x1 conv head, deterministic random init, (K, C) layout
        "conv_w": 0.1 * jax.random.normal(k_w, (num_classes, c), jnp.float32),
        "conv_b": 0.01 * jax.random.normal(k_b, (num_classes,), jnp.float32),
    }


if __name__ == "__main__":
    N, C, H, W = 2, 4, 16, 16
    NUM_CLASSES = 3

    key = jax.random.PRNGKey(0)
    k_x, k_p = jax.random.split(key)
    x = jax.random.normal(k_x, (N, C, H, W), jnp.float32)
    params = init_params(C, H, W, NUM_CLASSES, k_p)

    out = jax.jit(filter_seg_model)(x, params)
    jax.block_until_ready(out)

    assert out.shape == (N, NUM_CLASSES, H, W), out.shape
    assert bool(jnp.all(jnp.isfinite(out)))
    print("KERNEL_OK")
</pallas_src>

<mosaic_0001>
module attributes {stable_mosaic.version = 11 : i64} {
  func.func @_spectrum_kernel(%arg0: i32, %arg1: i32, %arg2: memref<5x128xf32, #tpu.memory_space<vmem>>, %arg3: memref<5x128xf32, #tpu.memory_space<vmem>>, %arg4: memref<5x128xf32, #tpu.memory_space<vmem>>, %arg5: memref<5x128xf32, #tpu.memory_space<vmem>>, %arg6: memref<1x5x128xf32, #tpu.memory_space<vmem>>, %arg7: memref<1x5x128xf32, #tpu.memory_space<vmem>>, %arg8: memref<1x5x128xf32, #tpu.memory_space<vmem>>, %arg9: memref<1x5x128xf32, #tpu.memory_space<vmem>>) attributes {dimension_semantics = [#tpu.dimension_semantics<parallel>, #tpu.dimension_semantics<parallel>], iteration_bounds = array<i64: 1, 2>, scalar_prefetch = 0 : i64, scratch_operands = 0 : i64, tpu.core_type = #tpu.core_type<tc>, window_params = [{transform_indices = @transform_0, window_bounds = array<i64: 5, 128>}, {transform_indices = @transform_1, window_bounds = array<i64: 5, 128>}, {transform_indices = @transform_2, window_bounds = array<i64: 5, 128>}, {transform_indices = @transform_3, window_bounds = array<i64: 5, 128>}, {transform_indices = @transform_4, window_bounds = array<i64: 1, 5, 128>}, {transform_indices = @transform_5, window_bounds = array<i64: 1, 5, 128>}, {transform_indices = @transform_6, window_bounds = array<i64: 1, 5, 128>}, {transform_indices = @transform_7, window_bounds = array<i64: 1, 5, 128>}]} {
    %c0 = arith.constant 0 : index
    %c0_0 = arith.constant 0 : index
    %0 = vector.load %arg2[%c0, %c0_0] : memref<5x128xf32, #tpu.memory_space<vmem>>, vector<5x128xf32>
    %cst = arith.constant 0.000000e+00 : f32
    %1 = vector.broadcast %cst : f32 to vector<5x128xf32>
    %2 = arith.maximumf %0, %1 : vector<5x128xf32>
    %c0_1 = arith.constant 0 : index
    %c0_2 = arith.constant 0 : index
    %3 = vector.load %arg3[%c0_1, %c0_2] : memref<5x128xf32, #tpu.memory_space<vmem>>, vector<5x128xf32>
    %cst_3 = arith.constant 0.000000e+00 : f32
    %4 = vector.broadcast %cst_3 : f32 to vector<5x128xf32>
    %5 = arith.maximumf %3, %4 : vector<5x128xf32>
    %c0_4 = arith.constant 0 : index
    %c0_5 = arith.constant 0 : index
    %6 = vector.load %arg4[%c0_4, %c0_5] : memref<5x128xf32, #tpu.memory_space<vmem>>, vector<5x128xf32>
    %cst_6 = arith.constant 0.000000e+00 : f32
    %7 = vector.broadcast %cst_6 : f32 to vector<5x128xf32>
    %8 = arith.maximumf %6, %7 : vector<5x128xf32>
    %c0_7 = arith.constant 0 : index
    %c0_8 = arith.constant 0 : index
    %9 = vector.load %arg5[%c0_7, %c0_8] : memref<5x128xf32, #tpu.memory_space<vmem>>, vector<5x128xf32>
    %cst_9 = arith.constant 0.000000e+00 : f32
    %10 = vector.broadcast %cst_9 : f32 to vector<5x128xf32>
    %11 = arith.maximumf %9, %10 : vector<5x128xf32>
    %c0_10 = arith.constant 0 : index
    %c0_11 = arith.constant 0 : index
    %c0_12 = arith.constant 0 : index
    %12 = vector.load %arg6[%c0_10, %c0_11, %c0_12] : memref<1x5x128xf32, #tpu.memory_space<vmem>>, vector<1x5x128xf32>
    %13 = vector.shape_cast %12 : vector<1x5x128xf32> to vector<5x128xf32>
    %c0_13 = arith.constant 0 : index
    %c0_14 = arith.constant 0 : index
    %c0_15 = arith.constant 0 : index
    %14 = vector.load %arg7[%c0_13, %c0_14, %c0_15] : memref<1x5x128xf32, #tpu.memory_space<vmem>>, vector<1x5x128xf32>
    %15 = vector.shape_cast %14 : vector<1x5x128xf32> to vector<5x128xf32>
    %16 = arith.mulf %13, %13 : vector<5x128xf32>
    %17 = arith.mulf %15, %15 : vector<5x128xf32>
    %18 = arith.addf %16, %17 : vector<5x128xf32>
    %19 = math.sqrt %18 : vector<5x128xf32>
    %20 = arith.mulf %2, %19 : vector<5x128xf32>
    %21 = arith.addf %20, %5 : vector<5x128xf32>
    %cst_16 = arith.constant 0.000000e+00 : f32
    %22 = vector.broadcast %cst_16 : f32 to vector<5x128xf32>
    %23 = arith.maximumf %21, %22 : vector<5x128xf32>
    %24 = arith.mulf %8, %23 : vector<5x128xf32>
    %25 = arith.addf %24, %11 : vector<5x128xf32>
    %cst_17 = arith.constant 1.000000e-16 : f32
    %26 = vector.broadcast %cst_17 : f32 to vector<5x128xf32>
    %27 = arith.addf %19, %26 : vector<5x128xf32>
    %28 = arith.divf %25, %27 : vector<5x128xf32>
    %29 = arith.mulf %13, %28 : vector<5x128xf32>
    %c0_18 = arith.constant 0 : index
    %c0_19 = arith.constant 0 : index
    %c0_20 = arith.constant 0 : index
    %30 = vector.load %arg8[%c0_18, %c0_19, %c0_20] : memref<1x5x128xf32, #tpu.memory_space<vmem>>, vector<1x5x128xf32>
    %31 = vector.shape_cast %30 : vector<1x5x128xf32> to vector<5x128xf32>
    %32 = vector.shape_cast %29 : vector<5x128xf32> to vector<1x5x128xf32>
    tpu.vector_store %arg8[%c0_18, %c0_19, %c0_20], %32 {strides = array<i32>} : memref<1x5x128xf32, #tpu.memory_space<vmem>>, vector<1x5x128xf32>,
    %33 = arith.mulf %15, %28 : vector<5x128xf32>
    %c0_21 = arith.constant 0 : index
    %c0_22 = arith.constant 0 : index
    %c0_23 = arith.constant 0 : index
    %34 = vector.load %arg9[%c0_21, %c0_22, %c0_23] : memref<1x5x128xf32, #tpu.memory_space<vmem>>, vector<1x5x128xf32>
    %35 = vector.shape_cast %34 : vector<1x5x128xf32> to vector<5x128xf32>
    %36 = vector.shape_cast %33 : vector<5x128xf32> to vector<1x5x128xf32>
    tpu.vector_store %arg9[%c0_21, %c0_22, %c0_23], %36 {strides = array<i32>} : memref<1x5x128xf32, #tpu.memory_space<vmem>>, vector<1x5x128xf32>,
    return
  }
  func.func @transform_0(%arg0: i32, %arg1: i32) -> (i32, i32) {
    %c0_i32 = arith.constant 0 : i32
    %c0_i32_0 = arith.constant 0 : i32
    return %arg0, %c0_i32 : i32, i32
  }
  func.func @transform_1(%arg0: i32, %arg1: i32) -> (i32, i32) {
    %c0_i32 = arith.constant 0 : i32
    %c0_i32_0 = arith.constant 0 : i32
    return %arg0, %c0_i32 : i32, i32
  }
  func.func @transform_2(%arg0: i32, %arg1: i32) -> (i32, i32) {
    %c0_i32 = arith.constant 0 : i32
    %c0_i32_0 = arith.constant 0 : i32
    return %arg0, %c0_i32 : i32, i32
  }
  func.func @transform_3(%arg0: i32, %arg1: i32) -> (i32, i32) {
    %c0_i32 = arith.constant 0 : i32
    %c0_i32_0 = arith.constant 0 : i32
    return %arg0, %c0_i32 : i32, i32
  }
  func.func @transform_4(%arg0: i32, %arg1: i32) -> (i32, i32, i32) {
    %c0_i32 = arith.constant 0 : i32
    %c0_i32_0 = arith.constant 0 : i32
    return %arg1, %arg0, %c0_i32 : i32, i32, i32
  }
  func.func @transform_5(%arg0: i32, %arg1: i32) -> (i32, i32, i32) {
    %c0_i32 = arith.constant 0 : i32
    %c0_i32_0 = arith.constant 0 : i32
    return %arg1, %arg0, %c0_i32 : i32, i32, i32
  }
  func.func @transform_6(%arg0: i32, %arg1: i32) -> (i32, i32, i32) {
    %c0_i32 = arith.constant 0 : i32
    %c0_i32_0 = arith.constant 0 : i32
    return %arg1, %arg0, %c0_i32 : i32, i32, i32
  }
  func.func @transform_7(%arg0: i32, %arg1: i32) -> (i32, i32, i32) {
    %c0_i32 = arith.constant 0 : i32
    %c0_i32_0 = arith.constant 0 : i32
    return %arg1, %arg0, %c0_i32 : i32, i32, i32
  }
}

module attributes {stable_mosaic.version = 11 : i64} {
  func.func @_pointwise_conv_kernel(%arg0: i32, %arg1: i32, %arg2: memref<3x4xf32, #tpu.memory_space<smem>>, %arg3: memref<3xf32, #tpu.memory_space<smem>>, %arg4: memref<1x4x2x128xf32, #tpu.memory_space<vmem>>, %arg5: memref<1x3x2x128xf32, #tpu.memory_space<vmem>>) attributes {dimension_semantics = [#tpu.dimension_semantics<parallel>, #tpu.dimension_semantics<parallel>], iteration_bounds = array<i64: 2, 1>, scalar_prefetch = 0 : i64, scratch_operands = 0 : i64, tpu.core_type = #tpu.core_type<tc>, window_params = [{transform_indices = @transform_0, window_bounds = array<i64: 3, 4>}, {transform_indices = @transform_1, window_bounds = array<i64: 3>}, {transform_indices = @transform_2, window_bounds = array<i64: 1, 4, 2, 128>}, {transform_indices = @transform_3, window_bounds = array<i64: 1, 3, 2, 128>}]} {
    %c0 = arith.constant 0 : index
    %c0_0 = arith.constant 0 : index
    %c0_1 = arith.constant 0 : index
    %c0_2 = arith.constant 0 : index
    %0 = vector.load %arg4[%c0, %c0_0, %c0_1, %c0_2] : memref<1x4x2x128xf32, #tpu.memory_space<vmem>>, vector<1x1x2x128xf32>
    %1 = vector.shape_cast %0 : vector<1x1x2x128xf32> to vector<2x128xf32>
    %c0_3 = arith.constant 0 : index
    %c1 = arith.constant 1 : index
    %c0_4 = arith.constant 0 : index
    %c0_5 = arith.constant 0 : index
    %2 = vector.load %arg4[%c0_3, %c1, %c0_4, %c0_5] : memref<1x4x2x128xf32, #tpu.memory_space<vmem>>, vector<1x1x2x128xf32>
    %3 = vector.shape_cast %2 : vector<1x1x2x128xf32> to vector<2x128xf32>
    %c0_6 = arith.constant 0 : index
    %c2 = arith.constant 2 : index
    %c0_7 = arith.constant 0 : index
    %c0_8 = arith.constant 0 : index
    %4 = vector.load %arg4[%c0_6, %c2, %c0_7, %c0_8] : memref<1x4x2x128xf32, #tpu.memory_space<vmem>>, vector<1x1x2x128xf32>
    %5 = vector.shape_cast %4 : vector<1x1x2x128xf32> to vector<2x128xf32>
    %c0_9 = arith.constant 0 : index
    %c3 = arith.constant 3 : index
    %c0_10 = arith.constant 0 : index
    %c0_11 = arith.constant 0 : index
    %6 = vector.load %arg4[%c0_9, %c3, %c0_10, %c0_11] : memref<1x4x2x128xf32, #tpu.memory_space<vmem>>, vector<1x1x2x128xf32>
    %7 = vector.shape_cast %6 : vector<1x1x2x128xf32> to vector<2x128xf32>
    %c0_12 = arith.constant 0 : index
    %c0_13 = arith.constant 0 : index
    %8 = memref.load %arg2[%c0_12, %c0_13] : memref<3x4xf32, #tpu.memory_space<smem>>
    %9 = vector.broadcast %8 : f32 to vector<2x128xf32>
    %10 = arith.mulf %1, %9 : vector<2x128xf32>
    %c0_14 = arith.constant 0 : index
    %11 = memref.load %arg3[%c0_14] : memref<3xf32, #tpu.memory_space<smem>>
    %12 = vector.broadcast %11 : f32 to vector<2x128xf32>
    %13 = arith.addf %10, %12 : vector<2x128xf32>
    %c0_15 = arith.constant 0 : index
    %c1_16 = arith.constant 1 : index
    %14 = memref.load %arg2[%c0_15, %c1_16] : memref<3x4xf32, #tpu.memory_space<smem>>
    %15 = vector.broadcast %14 : f32 to vector<2x128xf32>
    %16 = arith.mulf %3, %15 : vector<2x128xf32>
    %17 = arith.addf %13, %16 : vector<2x128xf32>
    %c0_17 = arith.constant 0 : index
    %c2_18 = arith.constant 2 : index
    %18 = memref.load %arg2[%c0_17, %c2_18] : memref<3x4xf32, #tpu.memory_space<smem>>
    %19 = vector.broadcast %18 : f32 to vector<2x128xf32>
    %20 = arith.mulf %5, %19 : vector<2x128xf32>
    %21 = arith.addf %17, %20 : vector<2x128xf32>
    %c0_19 = arith.constant 0 : index
    %c3_20 = arith.constant 3 : index
    %22 = memref.load %arg2[%c0_19, %c3_20] : memref<3x4xf32, #tpu.memory_space<smem>>
    %23 = vector.broadcast %22 : f32 to vector<2x128xf32>
    %24 = arith.mulf %7, %23 : vector<2x128xf32>
    %25 = arith.addf %21, %24 : vector<2x128xf32>
    %c0_21 = arith.constant 0 : index
    %c0_22 = arith.constant 0 : index
    %c0_23 = arith.constant 0 : index
    %c0_24 = arith.constant 0 : index
    %26 = vector.load %arg5[%c0_21, %c0_22, %c0_23, %c0_24] : memref<1x3x2x128xf32, #tpu.memory_space<vmem>>, vector<1x1x2x128xf32>
    %27 = vector.shape_cast %26 : vector<1x1x2x128xf32> to vector<2x128xf32>
    %28 = vector.shape_cast %25 : vector<2x128xf32> to vector<1x1x2x128xf32>
    tpu.vector_store %arg5[%c0_21, %c0_22, %c0_23, %c0_24], %28 {strides = array<i32>} : memref<1x3x2x128xf32, #tpu.memory_space<vmem>>, vector<1x1x2x128xf32>,
    %c1_25 = arith.constant 1 : index
    %c0_26 = arith.constant 0 : index
    %29 = memref.load %arg2[%c1_25, %c0_26] : memref<3x4xf32, #tpu.memory_space<smem>>
    %30 = vector.broadcast %29 : f32 to vector<2x128xf32>
    %31 = arith.mulf %1, %30 : vector<2x128xf32>
    %c1_27 = arith.constant 1 : index
    %32 = memref.load %arg3[%c1_27] : memref<3xf32, #tpu.memory_space<smem>>
    %33 = vector.broadcast %32 : f32 to vector<2x128xf32>
    %34 = arith.addf %31, %33 : vector<2x128xf32>
    %c1_28 = arith.constant 1 : index
    %c1_29 = arith.constant 1 : index
    %35 = memref.load %arg2[%c1_28, %c1_29] : memref<3x4xf32, #tpu.memory_space<smem>>
    %36 = vector.broadcast %35 : f32 to vector<2x128xf32>
    %37 = arith.mulf %3, %36 : vector<2x128xf32>
    %38 = arith.addf %34, %37 : vector<2x128xf32>
    %c1_30 = arith.constant 1 : index
    %c2_31 = arith.constant 2 : index
    %39 = memref.load %arg2[%c1_30, %c2_31] : memref<3x4xf32, #tpu.memory_space<smem>>
    %40 = vector.broadcast %39 : f32 to vector<2x128xf32>
    %41 = arith.mulf %5, %40 : vector<2x128xf32>
    %42 = arith.addf %38, %41 : vector<2x128xf32>
    %c1_32 = arith.constant 1 : index
    %c3_33 = arith.constant 3 : index
    %43 = memref.load %arg2[%c1_32, %c3_33] : memref<3x4xf32, #tpu.memory_space<smem>>
    %44 = vector.broadcast %43 : f32 to vector<2x128xf32>
    %45 = arith.mulf %7, %44 : vector<2x128xf32>
    %46 = arith.addf %42, %45 : vector<2x128xf32>
    %c0_34 = arith.constant 0 : index
    %c1_35 = arith.constant 1 : index
    %c0_36 = arith.constant 0 : index
    %c0_37 = arith.constant 0 : index
    %47 = vector.load %arg5[%c0_34, %c1_35, %c0_36, %c0_37] : memref<1x3x2x128xf32, #tpu.memory_space<vmem>>, vector<1x1x2x128xf32>
    %48 = vector.shape_cast %47 : vector<1x1x2x128xf32> to vector<2x128xf32>
    %49 = vector.shape_cast %46 : vector<2x128xf32> to vector<1x1x2x128xf32>
    tpu.vector_store %arg5[%c0_34, %c1_35, %c0_36, %c0_37], %49 {strides = array<i32>} : memref<1x3x2x128xf32, #tpu.memory_space<vmem>>, vector<1x1x2x128xf32>,
    %c2_38 = arith.constant 2 : index
    %c0_39 = arith.constant 0 : index
    %50 = memref.load %arg2[%c2_38, %c0_39] : memref<3x4xf32, #tpu.memory_space<smem>>
    %51 = vector.broadcast %50 : f32 to vector<2x128xf32>
    %52 = arith.mulf %1, %51 : vector<2x128xf32>
    %c2_40 = arith.constant 2 : index
    %53 = memref.load %arg3[%c2_40] : memref<3xf32, #tpu.memory_space<smem>>
    %54 = vector.broadcast %53 : f32 to vector<2x128xf32>
    %55 = arith.addf %52, %54 : vector<2x128xf32>
    %c2_41 = arith.constant 2 : index
    %c1_42 = arith.constant 1 : index
    %56 = memref.load %arg2[%c2_41, %c1_42] : memref<3x4xf32, #tpu.memory_space<smem>>
    %57 = vector.broadcast %56 : f32 to vector<2x128xf32>
    %58 = arith.mulf %3, %57 : vector<2x128xf32>
    %59 = arith.addf %55, %58 : vector<2x128xf32>
    %c2_43 = arith.constant 2 : index
    %c2_44 = arith.constant 2 : index
    %60 = memref.load %arg2[%c2_43, %c2_44] : memref<3x4xf32, #tpu.memory_space<smem>>
    %61 = vector.broadcast %60 : f32 to vector<2x128xf32>
    %62 = arith.mulf %5, %61 : vector<2x128xf32>
    %63 = arith.addf %59, %62 : vector<2x128xf32>
    %c2_45 = arith.constant 2 : index
    %c3_46 = arith.constant 3 : index
    %64 = memref.load %arg2[%c2_45, %c3_46] : memref<3x4xf32, #tpu.memory_space<smem>>
    %65 = vector.broadcast %64 : f32 to vector<2x128xf32>
    %66 = arith.mulf %7, %65 : vector<2x128xf32>
    %67 = arith.addf %63, %66 : vector<2x128xf32>
    %c0_47 = arith.constant 0 : index
    %c2_48 = arith.constant 2 : index
    %c0_49 = arith.constant 0 : index
    %c0_50 = arith.constant 0 : index
    %68 = vector.load %arg5[%c0_47, %c2_48, %c0_49, %c0_50] : memref<1x3x2x128xf32, #tpu.memory_space<vmem>>, vector<1x1x2x128xf32>
    %69 = vector.shape_cast %68 : vector<1x1x2x128xf32> to vector<2x128xf32>
    %70 = vector.shape_cast %67 : vector<2x128xf32> to vector<1x1x2x128xf32>
    tpu.vector_store %arg5[%c0_47, %c2_48, %c0_49, %c0_50], %70 {strides = array<i32>} : memref<1x3x2x128xf32, #tpu.memory_space<vmem>>, vector<1x1x2x128xf32>,
    return
  }
  func.func @transform_0(%arg0: i32, %arg1: i32) -> (i32, i32) {
    %c0_i32 = arith.constant 0 : i32
    %c0_i32_0 = arith.constant 0 : i32
    %c0_i32_1 = arith.constant 0 : i32
    return %c0_i32, %c0_i32_0 : i32, i32
  }
  func.func @transform_1(%arg0: i32, %arg1: i32) -> i32 {
    %c0_i32 = arith.constant 0 : i32
    %c0_i32_0 = arith.constant 0 : i32
    return %c0_i32 : i32
  }
  func.func @transform_2(%arg0: i32, %arg1: i32) -> (i32, i32, i32, i32) {
    %c0_i32 = arith.constant 0 : i32
    %c0_i32_0 = arith.constant 0 : i32
    %c0_i32_1 = arith.constant 0 : i32
    return %arg0, %c0_i32, %arg1, %c0_i32_0 : i32, i32, i32, i32
  }
  func.func @transform_3(%arg0: i32, %arg1: i32) -> (i32, i32, i32, i32) {
    %c0_i32 = arith.constant 0 : i32
    %c0_i32_0 = arith.constant 0 : i32
    %c0_i32_1 = arith.constant 0 : i32
    return %arg0, %c0_i32, %arg1, %c0_i32_0 : i32, i32, i32, i32
  }
}

</mosaic_0001>

<llo_original>
// kernel: filter_seg_model.2
$region0: #{filter_seg_model.2}
  #allocation0 [shape = 'u32[]', space=smem, size = 0x4, offset = 0x4, fixed_abs, tag = 'smem constant byte address 0x4 - core index']
  #allocation1 [shape = 'u32[144,128]{1,0:T(1,128)}', space=vmem, size = 0x12000, scoped, tag = 'internal scratch']
  %s0 = inlined_call_operand.vmem [shape: f32[5,128], index: 0, kind: input, shape index: {}]
  %s1 = inlined_call_operand.vmem [shape: f32[5,128], index: 1, kind: input, shape index: {}]
  %s2 = inlined_call_operand.vmem [shape: f32[5,128], index: 2, kind: input, shape index: {}]
  %s3 = inlined_call_operand.vmem [shape: f32[5,128], index: 3, kind: input, shape index: {}]
  %s4 = inlined_call_operand.vmem [shape: f32[2,5,128], index: 4, kind: input, shape index: {}]
  %s5 = inlined_call_operand.vmem [shape: f32[2,5,128], index: 5, kind: input, shape index: {}]
  %s6 = inlined_call_operand.vmem [shape: f32[2,5,128], index: 6, kind: output, shape index: {0}]
  %s7 = inlined_call_operand.vmem [shape: f32[2,5,128], index: 7, kind: output, shape index: {1}]
  %8 = xla_tuple %s6, %s7
  %s9 = sld [smem:[#allocation0]]
  $region65: #{filter_seg_model.2} parent=0
    _
  %s11 = ssub.s32 1, %s9
  %s12 = scalar_select 0, %s11, %s9
  loop: start=0, step=1, limit=4
  $region2: #{filter_seg_model.2} parent=0 // loop_pre_header
    _
  $region3: #{filter_seg_model.2} parent=0 // loop_header
    %s14 = sphi 0, %s18
    %p15 = scmp.ge.s32.totalorder %s14, 4
    %s21 = sphi 0, %s33
    %s22 = sphi 0, %s29
    %s23 = sphi 0, %s21
    %s24 = sphi 0, %s22
    %s25 = sphi 0, %s23
    %s26 = sphi 0, %s24
    %s36 = sphi 0, %s38
    %s39 = sphi 0, %s36
    %s40 = sphi 0, %s39
    %s56 = sphi 0, %s40
    %s62 = sphi 0, %s64
    %s65 = sphi 0, %s62
    %s66 = sphi 0, %s65
    %s82 = sphi 0, %s66
    %s88 = sphi 0, %s90
    %s91 = sphi 0, %s88
    %s92 = sphi 0, %s91
    %s108 = sphi 0, %s92
    %s114 = sphi 0, %s116
    %s117 = sphi 0, %s114
    %s118 = sphi 0, %s117
    %s134 = sphi 0, %s118
    %s142 = sphi 0, %s144
    %s145 = sphi 0, %s142
    %s146 = sphi 0, %s145
    %s162 = sphi 0, %s146
    %s170 = sphi 0, %s172
    %s173 = sphi 0, %s170
    %s174 = sphi 0, %s173
    %s190 = sphi 0, %s174
    %s198 = sphi 0, %s200
    %s201 = sphi 0, %s198
    %s202 = sphi 0, %s201
    %s218 = sphi 0, %s202
    %s226 = sphi 0, %s228
    %s229 = sphi 0, %s226
    %s230 = sphi 0, %s229
    %s246 = sphi 0, %s230
  $region4: #{filter_seg_model.2} parent=0 // loop_header_branch
    %17 = sbr.rel (%p15) target = $region8
  $region5: #{filter_seg_model.2} parent=0 // loop_body
    %s19 = ssub.s32 %s14, 1
    %s20 = ssub.s32 %s14, 2
    %s27 = sadd.s32 1, %s22
    %p28 = scmp.ge.s32.totalorder %s27, 2
    %s29 = scalar_select %p28, 0, %s27
    %s30 = sadd.s32 1, %s21
    %s31 = scalar_select %p28, %s30, %s21
    %p32 = scmp.ge.s32.totalorder %s31, 1
    %s33 = scalar_select %p32, 0, %s31
    %s34 = ssub.s32 %s21, %s33
    %p35 = scmp.eq.s32.totalorder %s34, 0
    %s37 = sadd.s32 %s36, 1
    %s38 = scalar_select %p35, %s36, %s37
    %p41 = pneg %p35
    %p42 = scmp.eq.s32.totalorder %s14, 1
    %p43 = por %p41, %p42
    %p44 = scmp.ne.s32.totalorder %s36, %s39
    %p45 = scmp.eq.s32.totalorder %s14, 0
    %p46 = por %p44, %p45
    %p47 = scmp.ne.s32.totalorder %s36, %s39
    %p48 = scmp.eq.s32.totalorder %s19, 1
    %p49 = por %p47, %p48
    %p50 = scmp.ne.s32.totalorder %s39, %s40
    %p51 = scmp.eq.s32.totalorder %s19, 0
    %p52 = por %p50, %p51
    %p53 = scmp.ne.s32.totalorder %s39, %s40
    %p54 = scmp.eq.s32.totalorder %s20, 1
    %p55 = por %p53, %p54
    %p57 = scmp.ne.s32.totalorder %s40, %s56
    %p58 = scmp.eq.s32.totalorder %s20, 0
    %p59 = por %p57, %p58
    %s60 = ssub.s32 %s21, %s33
    %p61 = scmp.eq.s32.totalorder %s60, 0
    %s63 = sadd.s32 %s62, 1
    %s64 = scalar_select %p61, %s62, %s63
    %p67 = pneg %p61
    %p68 = scmp.eq.s32.totalorder %s14, 1
    %p69 = por %p67, %p68
    %p70 = scmp.ne.s32.totalorder %s62, %s65
    %p71 = scmp.eq.s32.totalorder %s14, 0
    %p72 = por %p70, %p71
    %p73 = scmp.ne.s32.totalorder %s62, %s65
    %p74 = scmp.eq.s32.totalorder %s19, 1
    %p75 = por %p73, %p74
    %p76 = scmp.ne.s32.totalorder %s65, %s66
    %p77 = scmp.eq.s32.totalorder %s19, 0
    %p78 = por %p76, %p77
    %p79 = scmp.ne.s32.totalorder %s65, %s66
    %p80 = scmp.eq.s32.totalorder %s20, 1
    %p81 = por %p79, %p80
    %p83 = scmp.ne.s32.totalorder %s66, %s82
    %p84 = scmp.eq.s32.totalorder %s20, 0
    %p85 = por %p83, %p84
    %s86 = ssub.s32 %s21, %s33
    %p87 = scmp.eq.s32.totalorder %s86, 0
    %s89 = sadd.s32 %s88, 1
    %s90 = scalar_select %p87, %s88, %s89
    %p93 = pneg %p87
    %p94 = scmp.eq.s32.totalorder %s14, 1
    %p95 = por %p93, %p94
    %p96 = scmp.ne.s32.totalorder %s88, %s91
    %p97 = scmp.eq.s32.totalorder %s14, 0
    %p98 = por %p96, %p97
    %p99 = scmp.ne.s32.totalorder %s88, %s91
    %p100 = scmp.eq.s32.totalorder %s19, 1
    %p101 = por %p99, %p100
    %p102 = scmp.ne.s32.totalorder %s91, %s92
    %p103 = scmp.eq.s32.totalorder %s19, 0
    %p104 = por %p102, %p103
    %p105 = scmp.ne.s32.totalorder %s91, %s92
    %p106 = scmp.eq.s32.totalorder %s20, 1
    %p107 = por %p105, %p106
    %p109 = scmp.ne.s32.totalorder %s92, %s108
    %p110 = scmp.eq.s32.totalorder %s20, 0
    %p111 = por %p109, %p110
    %s112 = ssub.s32 %s21, %s33
    %p113 = scmp.eq.s32.totalorder %s112, 0
    %s115 = sadd.s32 %s114, 1
    %s116 = scalar_select %p113, %s114, %s115
    %p119 = pneg %p113
    %p120 = scmp.eq.s32.totalorder %s14, 1
    %p121 = por %p119, %p120
    %p122 = scmp.ne.s32.totalorder %s114, %s117
    %p123 = scmp.eq.s32.totalorder %s14, 0
    %p124 = por %p122, %p123
    %p125 = scmp.ne.s32.totalorder %s114, %s117
    %p126 = scmp.eq.s32.totalorder %s19, 1
    %p127 = por %p125, %p126
    %p128 = scmp.ne.s32.totalorder %s117, %s118
    %p129 = scmp.eq.s32.totalorder %s19, 0
    %p130 = por %p128, %p129
    %p131 = scmp.ne.s32.totalorder %s117, %s118
    %p132 = scmp.eq.s32.totalorder %s20, 1
    %p133 = por %p131, %p132
    %p135 = scmp.ne.s32.totalorder %s118, %s134
    %p136 = scmp.eq.s32.totalorder %s20, 0
    %p137 = por %p135, %p136
    %s138 = ssub.s32 %s22, %s29
    %s139 = ssub.s32 %s21, %s33
    %s140 = sor.u32 %s138, %s139
    %p141 = scmp.eq.s32.totalorder %s140, 0
    %s143 = sadd.s32 %s142, 1
    %s144 = scalar_select %p141, %s142, %s143
    %p147 = pneg %p141
    %p148 = scmp.eq.s32.totalorder %s14, 1
    %p149 = por %p147, %p148
    %p150 = scmp.ne.s32.totalorder %s142, %s145
    %p151 = scmp.eq.s32.totalorder %s14, 0
    %p152 = por %p150, %p151
    %p153 = scmp.ne.s32.totalorder %s142, %s145
    %p154 = scmp.eq.s32.totalorder %s19, 1
    %p155 = por %p153, %p154
    %p156 = scmp.ne.s32.totalorder %s145, %s146
    %p157 = scmp.eq.s32.totalorder %s19, 0
    %p158 = por %p156, %p157
    %p159 = scmp.ne.s32.totalorder %s145, %s146
    %p160 = scmp.eq.s32.totalorder %s20, 1
    %p161 = por %p159, %p160
    %p163 = scmp.ne.s32.totalorder %s146, %s162
    %p164 = scmp.eq.s32.totalorder %s20, 0
    %p165 = por %p163, %p164
    %s166 = ssub.s32 %s22, %s29
    %s167 = ssub.s32 %s21, %s33
    %s168 = sor.u32 %s166, %s167
    %p169 = scmp.eq.s32.totalorder %s168, 0
    %s171 = sadd.s32 %s170, 1
    %s172 = scalar_select %p169, %s170, %s171
    %p175 = pneg %p169
    %p176 = scmp.eq.s32.totalorder %s14, 1
    %p177 = por %p175, %p176
    %p178 = scmp.ne.s32.totalorder %s170, %s173
    %p179 = scmp.eq.s32.totalorder %s14, 0
    %p180 = por %p178, %p179
    %p181 = scmp.ne.s32.totalorder %s170, %s173
    %p182 = scmp.eq.s32.totalorder %s19, 1
    %p183 = por %p181, %p182
    %p184 = scmp.ne.s32.totalorder %s173, %s174
    %p185 = scmp.eq.s32.totalorder %s19, 0
    %p186 = por %p184, %p185
    %p187 = scmp.ne.s32.totalorder %s173, %s174
    %p188 = scmp.eq.s32.totalorder %s20, 1
    %p189 = por %p187, %p188
    %p191 = scmp.ne.s32.totalorder %s174, %s190
    %p192 = scmp.eq.s32.totalorder %s20, 0
    %p193 = por %p191, %p192
    %s194 = ssub.s32 %s22, %s29
    %s195 = ssub.s32 %s21, %s33
    %s196 = sor.u32 %s194, %s195
    %p197 = scmp.eq.s32.totalorder %s196, 0
    %s199 = sadd.s32 %s198, 1
    %s200 = scalar_select %p197, %s198, %s199
    %p203 = pneg %p197
    %p204 = scmp.eq.s32.totalorder %s14, 1
    %p205 = por %p203, %p204
    %p206 = scmp.ne.s32.totalorder %s198, %s201
    %p207 = scmp.eq.s32.totalorder %s14, 0
    %p208 = por %p206, %p207
    %p209 = scmp.ne.s32.totalorder %s198, %s201
    %p210 = scmp.eq.s32.totalorder %s19, 1
    %p211 = por %p209, %p210
    %p212 = scmp.ne.s32.totalorder %s201, %s202
    %p213 = scmp.eq.s32.totalorder %s19, 0
    %p214 = por %p212, %p213
    %p215 = scmp.ne.s32.totalorder %s201, %s202
    %p216 = scmp.eq.s32.totalorder %s20, 1
    %p217 = por %p215, %p216
    %p219 = scmp.ne.s32.totalorder %s202, %s218
    %p220 = scmp.eq.s32.totalorder %s20, 0
    %p221 = por %p219, %p220
    %s222 = ssub.s32 %s22, %s29
    %s223 = ssub.s32 %s21, %s33
    %s224 = sor.u32 %s222, %s223
    %p225 = scmp.eq.s32.totalorder %s224, 0
    %s227 = sadd.s32 %s226, 1
    %s228 = scalar_select %p225, %s226, %s227
    %p231 = pneg %p225
    %p232 = scmp.eq.s32.totalorder %s14, 1
    %p233 = por %p231, %p232
    %p234 = scmp.ne.s32.totalorder %s226, %s229
    %p235 = scmp.eq.s32.totalorder %s14, 0
    %p236 = por %p234, %p235
    %p237 = scmp.ne.s32.totalorder %s226, %s229
    %p238 = scmp.eq.s32.totalorder %s19, 1
    %p239 = por %p237, %p238
    %p240 = scmp.ne.s32.totalorder %s229, %s230
    %p241 = scmp.eq.s32.totalorder %s19, 0
    %p242 = por %p240, %p241
    %p243 = scmp.ne.s32.totalorder %s229, %s230
    %p244 = scmp.eq.s32.totalorder %s20, 1
    %p245 = por %p243, %p244
    %p247 = scmp.ne.s32.totalorder %s230, %s246
    %p248 = scmp.eq.s32.totalorder %s20, 0
    %p249 = por %p247, %p248
    %p250 = scmp.le.s32.totalorder 1, %s14
    %p251 = scmp.lt.s32.totalorder %s14, 3
    %p252 = pnand %p250, %p251
    %p253 = pneg %p252
    // Predicated region
    $region9: #{filter_seg_model.2} parent=5 // pred_check
      _
    $region10: #{filter_seg_model.2} parent=5 // pred_check_branch
      %255 = sbr.rel (%p252) target = $region12
    $region11: #{filter_seg_model.2} parent=5 // pred_region
      %s256 = ssub.s32 %s14, 1
      // Predicated region
      $region13: #{filter_seg_model.2} parent=11 // pred_check
        %p257 = pneg %p52
      $region14: #{filter_seg_model.2} parent=11 // pred_check_branch
        %259 = sbr.rel (%p257) target = $region16
      $region15: #{filter_seg_model.2} parent=11 // pred_region
        %p260 = scmp.lt.s32.totalorder %s23, 0
        %s261 = scalar_select %p260, %s23, 0
        %s262 = smul.addr %s261, 8
        %s263 = scalar_lea.vmem %s0, %s262
      $region16: #{filter_seg_model.2} parent=11 // pred_fallthru
        _
      // Predicated region
      $region17: #{filter_seg_model.2} parent=11 // pred_check
        %p264 = pneg %p78
      $region18: #{filter_seg_model.2} parent=11 // pred_check_branch
        %266 = sbr.rel (%p264) target = $region20
      $region19: #{filter_seg_model.2} parent=11 // pred_region
        %p267 = scmp.lt.s32.totalorder %s23, 0
        %s268 = scalar_select %p267, %s23, 0
        %s269 = smul.addr %s268, 8
        %s270 = scalar_lea.vmem %s1, %s269
      $region20: #{filter_seg_model.2} parent=11 // pred_fallthru
        _
      // Predicated region
      $region21: #{filter_seg_model.2} parent=11 // pred_check
        %p271 = pneg %p104
      $region22: #{filter_seg_model.2} parent=11 // pred_check_branch
        %273 = sbr.rel (%p271) target = $region24
      $region23: #{filter_seg_model.2} parent=11 // pred_region
        %p274 = scmp.lt.s32.totalorder %s23, 0
        %s275 = scalar_select %p274, %s23, 0
        %s276 = smul.addr %s275, 8
        %s277 = scalar_lea.vmem %s2, %s276
      $region24: #{filter_seg_model.2} parent=11 // pred_fallthru
        _
      // Predicated region
      $region25: #{filter_seg_model.2} parent=11 // pred_check
        %p278 = pneg %p130
      $region26: #{filter_seg_model.2} parent=11 // pred_check_branch
        %280 = sbr.rel (%p278) target = $region28
      $region27: #{filter_seg_model.2} parent=11 // pred_region
        %p281 = scmp.lt.s32.totalorder %s23, 0
        %s282 = scalar_select %p281, %s23, 0
        %s283 = smul.addr %s282, 8
        %s284 = scalar_lea.vmem %s3, %s283
      $region28: #{filter_seg_model.2} parent=11 // pred_fallthru
        _
    $region12: #{filter_seg_model.2} parent=5 // pred_fallthru
      _
    %p285 = scmp.lt.s32.totalorder %s14, 2
    // Predicated region
    $region29: #{filter_seg_model.2} parent=5 // pred_check
      %p286 = pneg %p285
    $region30: #{filter_seg_model.2} parent=5 // pred_check_branch
      %288 = sbr.rel (%p286) target = $region32
    $region31: #{filter_seg_model.2} parent=5 // pred_region
      // Predicated region
      $region33: #{filter_seg_model.2} parent=31 // pred_check
        %p289 = pneg %p152
      $region34: #{filter_seg_model.2} parent=31 // pred_check_branch
        %291 = sbr.rel (%p289) target = $region36
      $region35: #{filter_seg_model.2} parent=31 // pred_region
        %p292 = scmp.lt.s32.totalorder %s22, 1
        %s293 = scalar_select %p292, %s22, 1
        %p294 = scmp.lt.s32.totalorder %s21, 0
        %s295 = scalar_select %p294, %s21, 0
        %s296 = sadd.s32 %s295, %s293
        %s297 = smul.addr %s296, 8
        %s298 = scalar_lea.vmem %s4, %s297
      $region36: #{filter_seg_model.2} parent=31 // pred_fallthru
        _
      // Predicated region
      $region37: #{filter_seg_model.2} parent=31 // pred_check
        %p299 = pneg %p180
      $region38: #{filter_seg_model.2} parent=31 // pred_check_branch
        %301 = sbr.rel (%p299) target = $region40
      $region39: #{filter_seg_model.2} parent=31 // pred_region
        %p302 = scmp.lt.s32.totalorder %s22, 1
        %s303 = scalar_select %p302, %s22, 1
        %p304 = scmp.lt.s32.totalorder %s21, 0
        %s305 = scalar_select %p304, %s21, 0
        %s306 = sadd.s32 %s305, %s303
        %s307 = smul.addr %s306, 8
        %s308 = scalar_lea.vmem %s5, %s307
      $region40: #{filter_seg_model.2} parent=31 // pred_fallthru
        _
    $region32: #{filter_seg_model.2} parent=5 // pred_fallthru
      _
    %p309 = scmp.le.s32.totalorder 1, %s14
    %p310 = scmp.lt.s32.totalorder %s14, 3
    %p311 = pnand %p309, %p310
    %p312 = pneg %p311
    // Predicated region
    $region41: #{filter_seg_model.2} parent=5 // pred_check
      _
    $region42: #{filter_seg_model.2} parent=5 // pred_check_branch
      %314 = sbr.rel (%p311) target = $region44
    $region43: #{filter_seg_model.2} parent=5 // pred_region
      %s315 = ssub.s32 %s14, 1
      %p316 = scmp.lt.s32.totalorder %s23, 0
      %s317 = scalar_select %p316, %s23, 0
      %s318 = smul.addr %s317, 8
      %s319 = scalar_lea.vmem %s0, %s318
      %p320 = pneg %p52
      %p321 = pneg %p49
      %p322 = scmp.lt.s32.totalorder %s23, 0
      %s323 = scalar_select %p322, %s23, 0
      %s324 = smul.addr %s323, 8
      %s325 = scalar_lea.vmem %s1, %s324
      %p326 = pneg %p78
      %p327 = pneg %p75
      %p328 = scmp.lt.s32.totalorder %s23, 0
      %s329 = scalar_select %p328, %s23, 0
      %s330 = smul.addr %s329, 8
      %s331 = scalar_lea.vmem %s2, %s330
      %p332 = pneg %p104
      %p333 = pneg %p101
      %p334 = scmp.lt.s32.totalorder %s23, 0
      %s335 = scalar_select %p334, %s23, 0
      %s336 = smul.addr %s335, 8
      %s337 = scalar_lea.vmem %s3, %s336
      %p338 = pneg %p130
      %p339 = pneg %p127
      %p340 = scmp.lt.s32.totalorder %s24, 1
      %s341 = scalar_select %p340, %s24, 1
      %p342 = scmp.lt.s32.totalorder %s23, 0
      %s343 = scalar_select %p342, %s23, 0
      %s344 = sadd.s32 %s343, %s341
      %s345 = smul.addr %s344, 8
      %s346 = scalar_lea.vmem %s4, %s345
      %p347 = pneg %p158
      %p348 = pneg %p155
      %p349 = scmp.lt.s32.totalorder %s24, 1
      %s350 = scalar_select %p349, %s24, 1
      %p351 = scmp.lt.s32.totalorder %s23, 0
      %s352 = scalar_select %p351, %s23, 0
      %s353 = sadd.s32 %s352, %s350
      %s354 = smul.addr %s353, 8
      %s355 = scalar_lea.vmem %s5, %s354
      %p356 = pneg %p186
      %p357 = pneg %p183
      %p358 = pneg %p214
      %p359 = pneg %p211
      %p360 = scmp.lt.s32.totalorder %s24, 1
      %s361 = scalar_select %p360, %s24, 1
      %p362 = scmp.lt.s32.totalorder %s23, 0
      %s363 = scalar_select %p362, %s23, 0
      %s364 = sadd.s32 %s363, %s361
      %s365 = smul.addr %s364, 8
      %s366 = scalar_lea.vmem %s6, %s365
      %p367 = pneg %p242
      %p368 = pneg %p239
      %p369 = scmp.lt.s32.totalorder %s24, 1
      %s370 = scalar_select %p369, %s24, 1
      %p371 = scmp.lt.s32.totalorder %s23, 0
      %s372 = scalar_select %p371, %s23, 0
      %s373 = sadd.s32 %s372, %s370
      %s374 = smul.addr %s373, 8
      %s375 = scalar_lea.vmem %s7, %s374
      %p376 = scmp.lt.s32.totalorder %s23, 0
      %s377 = scalar_select %p376, %s23, 0
      %s378 = smul.addr %s377, 8
      %s379 = scalar_lea.vmem %s0, %s378
      %p380 = scmp.lt.s32.totalorder %s23, 0
      %s381 = scalar_select %p380, %s23, 0
      %s382 = smul.addr %s381, 8
      %s383 = scalar_lea.vmem %s1, %s382
      %p384 = scmp.lt.s32.totalorder %s23, 0
      %s385 = scalar_select %p384, %s23, 0
      %s386 = smul.addr %s385, 8
      %s387 = scalar_lea.vmem %s2, %s386
      %p388 = scmp.lt.s32.totalorder %s23, 0
      %s389 = scalar_select %p388, %s23, 0
      %s390 = smul.addr %s389, 8
      %s391 = scalar_lea.vmem %s3, %s390
      %p392 = scmp.lt.s32.totalorder %s24, 1
      %s393 = scalar_select %p392, %s24, 1
      %p394 = scmp.lt.s32.totalorder %s23, 0
      %s395 = scalar_select %p394, %s23, 0
      %s396 = sadd.s32 %s395, %s393
      %s397 = smul.addr %s396, 8
      %s398 = scalar_lea.vmem %s4, %s397
      %p399 = scmp.lt.s32.totalorder %s24, 1
      %s400 = scalar_select %p399, %s24, 1
      %p401 = scmp.lt.s32.totalorder %s23, 0
      %s402 = scalar_select %p401, %s23, 0
      %s403 = sadd.s32 %s402, %s400
      %s404 = smul.addr %s403, 8
      %s405 = scalar_lea.vmem %s5, %s404
      %p406 = scmp.lt.s32.totalorder %s24, 1
      %s407 = scalar_select %p406, %s24, 1
      %p408 = scmp.lt.s32.totalorder %s23, 0
      %s409 = scalar_select %p408, %s23, 0
      %s410 = sadd.s32 %s409, %s407
      %s411 = smul.addr %s410, 8
      %s412 = scalar_lea.vmem %s6, %s411
      %p413 = scmp.lt.s32.totalorder %s24, 1
      %s414 = scalar_select %p413, %s24, 1
      %p415 = scmp.lt.s32.totalorder %s23, 0
      %s416 = scalar_select %p415, %s23, 0
      %s417 = sadd.s32 %s416, %s414
      %s418 = smul.addr %s417, 8
      %s419 = scalar_lea.vmem %s7, %s418
      %v420 = vld [vmem:[%s379] sm:$0x1f]
      %v421 = vmax.f32 %v420, 0.0
      %v422 = vld [vmem:[%s383] sm:$0x1f]
      %v423 = vmax.f32 %v422, 0.0
      %v424 = vld [vmem:[%s387] sm:$0x1f]
      %v425 = vmax.f32 %v424, 0.0
      %v426 = vld [vmem:[%s391] sm:$0x1f]
      %v427 = vmax.f32 %v426, 0.0
      %v428 = vld [vmem:[%s398] sm:$0x1f]
      %v429 = vld [vmem:[%s405] sm:$0x1f]
      %v430 = vmul.f32 %v428, %v428
      %v431 = vmul.f32 %v429, %v429
      %v432 = vadd.f32 %v430, %v431
      %v433 = vrsqrt.pop %v432
      %v434 = vmul.f32 %v432, %v433
      %vm435 = vcmp.eq.f32.partialorder %v432, inf
      %v436 = vsel %vm435, %v432, %v434
      %vm437 = vcmp.eq.f32.partialorder %v432, 0.0
      %v438 = vand.u32 %v432, 2147483648
      %v439 = vsel %vm437, %v438, %v436
      %v440 = vmul.f32 %v421, %v439
      %v441 = vadd.f32 %v440, %v423
      %v442 = vmax.f32 %v441, 0.0
      %v443 = vmul.f32 %v425, %v442
      %v444 = vadd.f32 %v443, %v427
      %v445 = vadd.f32 %v439, 1e-16
      %v446 = vrcp.pop %v445
      %v447 = vmul.f32 %v444, %v446
      %v448 = vmul.f32 %v428, %v447
      %449 = vst [vmem:[%s412] sm:$0x1f] %v448
      %v450 = vmul.f32 %v429, %v447
      %451 = vst [vmem:[%s419] sm:$0x1f] %v450
      %p452 = scmp.lt.s32.totalorder %s24, 1
      %s453 = scalar_select %p452, %s24, 1
      %p454 = scmp.lt.s32.totalorder %s23, 0
      %s455 = scalar_select %p454, %s23, 0
      %s456 = sadd.s32 %s455, %s453
      %s457 = smul.addr %s456, 8
      %s458 = scalar_lea.vmem %s6, %s457
      %p459 = scmp.lt.s32.totalorder %s24, 1
      %s460 = scalar_select %p459, %s24, 1
      %p461 = scmp.lt.s32.totalorder %s23, 0
      %s462 = scalar_select %p461, %s23, 0
      %s463 = sadd.s32 %s462, %s460
      %s464 = smul.addr %s463, 8
      %s465 = scalar_lea.vmem %s7, %s464
      // Predicated region
      $region45: #{filter_seg_model.2} parent=43 // pred_check
        %p466 = pneg %p211
      $region46: #{filter_seg_model.2} parent=43 // pred_check_branch
        %468 = sbr.rel (%p466) target = $region48
      $region47: #{filter_seg_model.2} parent=43 // pred_region
        _
      $region48: #{filter_seg_model.2} parent=43 // pred_fallthru
        _
      // Predicated region
      $region49: #{filter_seg_model.2} parent=43 // pred_check
        %p469 = pneg %p239
      $region50: #{filter_seg_model.2} parent=43 // pred_check_branch
        %471 = sbr.rel (%p469) target = $region52
      $region51: #{filter_seg_model.2} parent=43 // pred_region
        _
      $region52: #{filter_seg_model.2} parent=43 // pred_fallthru
        _
    $region44: #{filter_seg_model.2} parent=5 // pred_fallthru
      _
    %p472 = scmp.le.s32.totalorder 2, %s14
    // Predicated region
    $region53: #{filter_seg_model.2} parent=5 // pred_check
      %p473 = pneg %p472
    $region54: #{filter_seg_model.2} parent=5 // pred_check_branch
      %475 = sbr.rel (%p473) target = $region56
    $region55: #{filter_seg_model.2} parent=5 // pred_region
      %s476 = ssub.s32 %s14, 2
      // Predicated region
      $region57: #{filter_seg_model.2} parent=55 // pred_check
        %p477 = pneg %p217
      $region58: #{filter_seg_model.2} parent=55 // pred_check_branch
        %479 = sbr.rel (%p477) target = $region60
      $region59: #{filter_seg_model.2} parent=55 // pred_region
        %p480 = scmp.lt.s32.totalorder %s26, 1
        %s481 = scalar_select %p480, %s26, 1
        %p482 = scmp.lt.s32.totalorder %s25, 0
        %s483 = scalar_select %p482, %s25, 0
        %s484 = sadd.s32 %s483, %s481
        %s485 = smul.addr %s484, 8
        %s486 = scalar_lea.vmem %s6, %s485
      $region60: #{filter_seg_model.2} parent=55 // pred_fallthru
        _
      // Predicated region
      $region61: #{filter_seg_model.2} parent=55 // pred_check
        %p487 = pneg %p245
      $region62: #{filter_seg_model.2} parent=55 // pred_check_branch
        %489 = sbr.rel (%p487) target = $region64
      $region63: #{filter_seg_model.2} parent=55 // pred_region
        %p490 = scmp.lt.s32.totalorder %s26, 1
        %s491 = scalar_select %p490, %s26, 1
        %p492 = scmp.lt.s32.totalorder %s25, 0
        %s493 = scalar_select %p492, %s25, 0
        %s494 = sadd.s32 %s493, %s491
        %s495 = smul.addr %s494, 8
        %s496 = scalar_lea.vmem %s7, %s495
      $region64: #{filter_seg_model.2} parent=55 // pred_fallthru
        _
    $region56: #{filter_seg_model.2} parent=5 // pred_fallthru
      _
  $region6: #{filter_seg_model.2} parent=0 // loop_footer
    %s18 = sadd.s32 1, %s14
  $region7: #{filter_seg_model.2} parent=0 // loop_footer_branch
    %13 = sbr.rel target = $region3
  $region8: #{filter_seg_model.2} parent=0 // loop_exit
    _

// kernel: reverse.1
$region0: #{reverse.1}
  #allocation0 [shape = 's32[1]{0}', space=sflag, size = 0x4, scoped, tag = 'scoped memory for reverse.1']
  %s0 = inlined_call_operand.vmem [shape: f32[2,4,16,7], index: 0, kind: input, shape index: {}]
  %s1 = inlined_call_operand.vmem [shape: f32[2,4,16,7], index: 1, kind: output, shape index: {}]
  %s2 = scalar_lea.vmem %s0, 24
  %v3 = vld [vmem:[%s2] sm:$0xf]
  %4 = vst [vmem:[%s1] sm:$0xf] %v3
  %s5 = scalar_lea.vmem %s0, 52
  %v6 = vld [vmem:[%s5] sm:$0xf]
  %s7 = scalar_lea.vmem %s1, 28
  %8 = vst [vmem:[%s7] sm:$0xf] %v6
  %s9 = scalar_lea.vmem %s0, 20
  %v10 = vld [vmem:[%s9] sm:$0xf]
  %s11 = scalar_lea.vmem %s1, 4
  %12 = vst [vmem:[%s11] sm:$0xf] %v10
  %s13 = scalar_lea.vmem %s0, 48
  %v14 = vld [vmem:[%s13] sm:$0xf]
  %s15 = scalar_lea.vmem %s1, 32
  %16 = vst [vmem:[%s15] sm:$0xf] %v14
  %s17 = scalar_lea.vmem %s0, 16
  %v18 = vld [vmem:[%s17] sm:$0xf]
  %s19 = scalar_lea.vmem %s1, 8
  %20 = vst [vmem:[%s19] sm:$0xf] %v18
  %s21 = scalar_lea.vmem %s0, 44
  %v22 = vld [vmem:[%s21] sm:$0xf]
  %s23 = scalar_lea.vmem %s1, 36
  %24 = vst [vmem:[%s23] sm:$0xf] %v22
  %s25 = scalar_lea.vmem %s0, 12
  %v26 = vld [vmem:[%s25] sm:$0xf]
  %s27 = scalar_lea.vmem %s1, 12
  %28 = vst [vmem:[%s27] sm:$0xf] %v26
  %s29 = scalar_lea.vmem %s0, 40
  %v30 = vld [vmem:[%s29] sm:$0xf]
  %s31 = scalar_lea.vmem %s1, 40
  %32 = vst [vmem:[%s31] sm:$0xf] %v30
  %s33 = scalar_lea.vmem %s0, 8
  %v34 = vld [vmem:[%s33] sm:$0xf]
  %s35 = scalar_lea.vmem %s1, 16
  %36 = vst [vmem:[%s35] sm:$0xf] %v34
  %s37 = scalar_lea.vmem %s0, 36
  %v38 = vld [vmem:[%s37] sm:$0xf]
  %s39 = scalar_lea.vmem %s1, 44
  %40 = vst [vmem:[%s39] sm:$0xf] %v38
  %s41 = scalar_lea.vmem %s0, 4
  %v42 = vld [vmem:[%s41] sm:$0xf]
  %s43 = scalar_lea.vmem %s1, 20
  %44 = vst [vmem:[%s43] sm:$0xf] %v42
  %s45 = scalar_lea.vmem %s0, 32
  %v46 = vld [vmem:[%s45] sm:$0xf]
  %s47 = scalar_lea.vmem %s1, 48
  %48 = vst [vmem:[%s47] sm:$0xf] %v46
  %v49 = vld [vmem:[%s0] sm:$0xf]
  %s50 = scalar_lea.vmem %s1, 24
  %51 = vst [vmem:[%s50] sm:$0xf] %v49
  %s52 = scalar_lea.vmem %s0, 28
  %v53 = vld [vmem:[%s52] sm:$0xf]
  %s54 = scalar_lea.vmem %s1, 52
  %55 = vst [vmem:[%s54] sm:$0xf] %v53

// kernel: filter_seg_model.3
$region0: #{filter_seg_model.3}
  #allocation0 [shape = 'u32[]', space=smem, size = 0x4, offset = 0x4, fixed_abs, tag = 'smem constant byte address 0x4 - core index']
  #allocation1 [shape = 'u32[144,128]{1,0:T(1,128)}', space=vmem, size = 0x12000, scoped, tag = 'internal scratch']
  %s0 = inlined_call_operand.vmem [shape: f32[3,4], index: 0, kind: input, shape index: {}]
  %s1 = inlined_call_operand.vmem [shape: f32[3], index: 1, kind: input, shape index: {}]
  %s2 = inlined_call_operand.vmem [shape: f32[2,4,2,128], index: 2, kind: input, shape index: {}]
  %s3 = inlined_call_operand.vmem [shape: f32[2,3,2,128], index: 3, kind: output, shape index: {}]
  %s4 = sld [smem:[#allocation0]]
  $region53: #{filter_seg_model.3} parent=0
    _
  %s6 = ssub.s32 1, %s4
  %s7 = scalar_select 0, %s6, %s4
  $region1: #{filter_seg_model.3} parent=0
    #allocation2 [shape = 'u8[2048]{0}', space=smem, size = 0x800, scoped, tag = 'input window, operand 0, single buffered']
    #allocation3 [shape = 's32[2]{0}', space=sflag, size = 0x8, scoped, tag = 'scoped memory for filter_seg_model.3']
    #allocation4 [shape = 'u8[512]{0}', space=smem, size = 0x200, scoped, tag = 'input window, operand 1, single buffered']
    #allocation5 [shape = 's32[1]{0}', space=sflag, size = 0x4, scoped, tag = 'scoped memory for filter_seg_model.3']
    %8 = vsyncpa [#allocation3], 0
    %9 = vsyncpa [#allocation5], 0
    loop: start=0, step=1, limit=4
    $region2: #{filter_seg_model.3} parent=1 // loop_pre_header
      _
    $region3: #{filter_seg_model.3} parent=1 // loop_header
      %s11 = sphi 0, %s15
      %p12 = scmp.ge.s32.totalorder %s11, 4
      %s18 = sphi 0, %s30
      %s19 = sphi 0, %s26
      %s20 = sphi 0, %s18
      %s21 = sphi 0, %s19
      %s22 = sphi 0, %s20
      %s23 = sphi 0, %s21
      %s31 = sphi 0, %s31
      %s33 = sphi 0, %s31
      %s34 = sphi 0, %s33
      %s48 = sphi 0, %s34
      %s52 = sphi 0, %s52
      %s54 = sphi 0, %s52
      %s55 = sphi 0, %s54
      %s69 = sphi 0, %s55
      %s77 = sphi 0, %s79
      %s80 = sphi 0, %s77
      %s81 = sphi 0, %s80
      %s97 = sphi 0, %s81
      %s105 = sphi 0, %s107
      %s108 = sphi 0, %s105
      %s109 = sphi 0, %s108
      %s125 = sphi 0, %s109
    $region4: #{filter_seg_model.3} parent=1 // loop_header_branch
      %14 = sbr.rel (%p12) target = $region8
    $region5: #{filter_seg_model.3} parent=1 // loop_body
      %s16 = ssub.s32 %s11, 1
      %s17 = ssub.s32 %s11, 2
      %s24 = sadd.s32 1, %s19
      %p25 = scmp.ge.s32.totalorder %s24, 1
      %s26 = scalar_select %p25, 0, %s24
      %s27 = sadd.s32 1, %s18
      %s28 = scalar_select %p25, %s27, %s18
      %p29 = scmp.ge.s32.totalorder %s28, 2
      %s30 = scalar_select %p29, 0, %s28
      %s32 = sadd.s32 %s31, 1
      %p35 = scmp.eq.s32.totalorder %s11, 1
      %p36 = scmp.ne.s32.totalorder %s31, %s33
      %p37 = scmp.eq.s32.totalorder %s11, 0
      %p38 = por %p36, %p37
      %p39 = scmp.ne.s32.totalorder %s31, %s33
      %p40 = scmp.eq.s32.totalorder %s16, 1
      %p41 = por %p39, %p40
      %p42 = scmp.ne.s32.totalorder %s33, %s34
      %p43 = scmp.eq.s32.totalorder %s16, 0
      %p44 = por %p42, %p43
      %p45 = scmp.ne.s32.totalorder %s33, %s34
      %p46 = scmp.eq.s32.totalorder %s17, 1
      %p47 = por %p45, %p46
      %p49 = scmp.ne.s32.totalorder %s34, %s48
      %p50 = scmp.eq.s32.totalorder %s17, 0
      %p51 = por %p49, %p50
      %s53 = sadd.s32 %s52, 1
      %p56 = scmp.eq.s32.totalorder %s11, 1
      %p57 = scmp.ne.s32.totalorder %s52, %s54
      %p58 = scmp.eq.s32.totalorder %s11, 0
      %p59 = por %p57, %p58
      %p60 = scmp.ne.s32.totalorder %s52, %s54
      %p61 = scmp.eq.s32.totalorder %s16, 1
      %p62 = por %p60, %p61
      %p63 = scmp.ne.s32.totalorder %s54, %s55
      %p64 = scmp.eq.s32.totalorder %s16, 0
      %p65 = por %p63, %p64
      %p66 = scmp.ne.s32.totalorder %s54, %s55
      %p67 = scmp.eq.s32.totalorder %s17, 1
      %p68 = por %p66, %p67
      %p70 = scmp.ne.s32.totalorder %s55, %s69
      %p71 = scmp.eq.s32.totalorder %s17, 0
      %p72 = por %p70, %p71
      %s73 = ssub.s32 %s18, %s30
      %s74 = ssub.s32 %s19, %s26
      %s75 = sor.u32 %s73, %s74
      %p76 = scmp.eq.s32.totalorder %s75, 0
      %s78 = sadd.s32 %s77, 1
      %s79 = scalar_select %p76, %s77, %s78
      %p82 = pneg %p76
      %p83 = scmp.eq.s32.totalorder %s11, 1
      %p84 = por %p82, %p83
      %p85 = scmp.ne.s32.totalorder %s77, %s80
      %p86 = scmp.eq.s32.totalorder %s11, 0
      %p87 = por %p85, %p86
      %p88 = scmp.ne.s32.totalorder %s77, %s80
      %p89 = scmp.eq.s32.totalorder %s16, 1
      %p90 = por %p88, %p89
      %p91 = scmp.ne.s32.totalorder %s80, %s81
      %p92 = scmp.eq.s32.totalorder %s16, 0
      %p93 = por %p91, %p92
      %p94 = scmp.ne.s32.totalorder %s80, %s81
      %p95 = scmp.eq.s32.totalorder %s17, 1
      %p96 = por %p94, %p95
      %p98 = scmp.ne.s32.totalorder %s81, %s97
      %p99 = scmp.eq.s32.totalorder %s17, 0
      %p100 = por %p98, %p99
      %s101 = ssub.s32 %s18, %s30
      %s102 = ssub.s32 %s19, %s26
      %s103 = sor.u32 %s101, %s102
      %p104 = scmp.eq.s32.totalorder %s103, 0
      %s106 = sadd.s32 %s105, 1
      %s107 = scalar_select %p104, %s105, %s106
      %p110 = pneg %p104
      %p111 = scmp.eq.s32.totalorder %s11, 1
      %p112 = por %p110, %p111
      %p113 = scmp.ne.s32.totalorder %s105, %s108
      %p114 = scmp.eq.s32.totalorder %s11, 0
      %p115 = por %p113, %p114
      %p116 = scmp.ne.s32.totalorder %s105, %s108
      %p117 = scmp.eq.s32.totalorder %s16, 1
      %p118 = por %p116, %p117
      %p119 = scmp.ne.s32.totalorder %s108, %s109
      %p120 = scmp.eq.s32.totalorder %s16, 0
      %p121 = por %p119, %p120
      %p122 = scmp.ne.s32.totalorder %s108, %s109
      %p123 = scmp.eq.s32.totalorder %s17, 1
      %p124 = por %p122, %p123
      %p126 = scmp.ne.s32.totalorder %s109, %s125
      %p127 = scmp.eq.s32.totalorder %s17, 0
      %p128 = por %p126, %p127
      %p129 = scmp.le.s32.totalorder 1, %s11
      %p130 = scmp.lt.s32.totalorder %s11, 3
      %p131 = pnand %p129, %p130
      %p132 = pneg %p131
      // Predicated region
      $region9: #{filter_seg_model.3} parent=5 // pred_check
        _
      $region10: #{filter_seg_model.3} parent=5 // pred_check_branch
        %134 = sbr.rel (%p131) target = $region12
      $region11: #{filter_seg_model.3} parent=5 // pred_region
        %s135 = ssub.s32 %s11, 1
        // Predicated region
        $region13: #{filter_seg_model.3} parent=11 // pred_check
          %p136 = pneg %p44
        $region14: #{filter_seg_model.3} parent=11 // pred_check_branch
          %138 = sbr.rel (%p136) target = $region16
        $region15: #{filter_seg_model.3} parent=11 // pred_region
          %s140 = ssub.s32 64, 64
          %141 = vsyncadd [#allocation3], %s140
          %s143 = sshll.u32 %s0, 4
          %s144 = int_to_ptr.vmem [resolvable:$true] %s143
          %146 = dma.vmem_to_smem %s144, 64, [#allocation2], [#allocation3]
        $region16: #{filter_seg_model.3} parent=11 // pred_fallthru
          _
        // Predicated region
        $region17: #{filter_seg_model.3} parent=11 // pred_check
          %p147 = pneg %p65
        $region18: #{filter_seg_model.3} parent=11 // pred_check_branch
          %149 = sbr.rel (%p147) target = $region20
        $region19: #{filter_seg_model.3} parent=11 // pred_region
          %s151 = ssub.s32 16, 16
          %152 = vsyncadd [#allocation5], %s151
          %s154 = sshll.u32 %s1, 4
          %s155 = int_to_ptr.vmem [resolvable:$true] %s154
          %157 = dma.vmem_to_smem %s155, 16, [#allocation4], [#allocation5]
        $region20: #{filter_seg_model.3} parent=11 // pred_fallthru
          _
      $region12: #{filter_seg_model.3} parent=5 // pred_fallthru
        _
      %p158 = scmp.lt.s32.totalorder %s11, 2
      // Predicated region
      $region21: #{filter_seg_model.3} parent=5 // pred_check
        %p159 = pneg %p158
      $region22: #{filter_seg_model.3} parent=5 // pred_check_branch
        %161 = sbr.rel (%p159) target = $region24
      $region23: #{filter_seg_model.3} parent=5 // pred_region
        // Predicated region
        $region25: #{filter_seg_model.3} parent=23 // pred_check
          %p162 = pneg %p87
        $region26: #{filter_seg_model.3} parent=23 // pred_check_branch
          %164 = sbr.rel (%p162) target = $region28
        $region27: #{filter_seg_model.3} parent=23 // pred_region
          %p165 = scmp.lt.s32.totalorder %s18, 1
          %s166 = scalar_select %p165, %s18, 1
          %p167 = scmp.lt.s32.totalorder %s19, 0
          %s168 = scalar_select %p167, %s19, 0
          %s169 = smul.addr %s166, 4
          %s170 = sadd.s32 %s168, %s169
          %s171 = smul.addr %s170, 2
          %s172 = scalar_lea.vmem %s2, %s171
        $region28: #{filter_seg_model.3} parent=23 // pred_fallthru
          _
      $region24: #{filter_seg_model.3} parent=5 // pred_fallthru
        _
      %p173 = scmp.le.s32.totalorder 1, %s11
      %p174 = scmp.lt.s32.totalorder %s11, 3
      %p175 = pnand %p173, %p174
      %p176 = pneg %p175
      // Predicated region
      $region29: #{filter_seg_model.3} parent=5 // pred_check
        _
      $region30: #{filter_seg_model.3} parent=5 // pred_check_branch
        %178 = sbr.rel (%p175) target = $region32
      $region31: #{filter_seg_model.3} parent=5 // pred_region
        %s179 = ssub.s32 %s11, 1
        // Predicated region
        $region33: #{filter_seg_model.3} parent=31 // pred_check
          %p180 = pneg %p44
        $region34: #{filter_seg_model.3} parent=31 // pred_check_branch
          %182 = sbr.rel (%p180) target = $region36
        $region35: #{filter_seg_model.3} parent=31 // pred_region
          %183 = dma.done [#allocation3], 64
        $region36: #{filter_seg_model.3} parent=31 // pred_fallthru
          _
        // Predicated region
        $region37: #{filter_seg_model.3} parent=31 // pred_check
          %p184 = pneg %p65
        $region38: #{filter_seg_model.3} parent=31 // pred_check_branch
          %186 = sbr.rel (%p184) target = $region40
        $region39: #{filter_seg_model.3} parent=31 // pred_region
          %187 = dma.done [#allocation5], 16
        $region40: #{filter_seg_model.3} parent=31 // pred_fallthru
          _
        %188 = sfence
        %p189 = pneg %p44
        %p190 = pneg %p41
        %p191 = pneg %p65
        %p192 = pneg %p62
        %p193 = scmp.lt.s32.totalorder %s20, 1
        %s194 = scalar_select %p193, %s20, 1
        %p195 = scmp.lt.s32.totalorder %s21, 0
        %s196 = scalar_select %p195, %s21, 0
        %s197 = smul.addr %s194, 4
        %s198 = sadd.s32 %s196, %s197
        %s199 = smul.addr %s198, 2
        %s200 = scalar_lea.vmem %s2, %s199
        %p201 = pneg %p93
        %p202 = pneg %p90
        %p203 = pneg %p121
        %p204 = pneg %p118
        %p205 = scmp.lt.s32.totalorder %s20, 1
        %s206 = scalar_select %p205, %s20, 1
        %p207 = scmp.lt.s32.totalorder %s21, 0
        %s208 = scalar_select %p207, %s21, 0
        %s209 = smul.addr %s206, 3
        %s210 = sadd.s32 %s208, %s209
        %s211 = smul.addr %s210, 2
        %s212 = scalar_lea.vmem %s3, %s211
        %p213 = scmp.lt.s32.totalorder %s20, 1
        %s214 = scalar_select %p213, %s20, 1
        %p215 = scmp.lt.s32.totalorder %s21, 0
        %s216 = scalar_select %p215, %s21, 0
        %s217 = smul.addr %s214, 4
        %s218 = sadd.s32 %s216, %s217
        %s219 = smul.addr %s218, 2
        %s220 = scalar_lea.vmem %s2, %s219
        %p221 = scmp.lt.s32.totalorder %s20, 1
        %s222 = scalar_select %p221, %s20, 1
        %p223 = scmp.lt.s32.totalorder %s21, 0
        %s224 = scalar_select %p223, %s21, 0
        %s225 = smul.addr %s222, 3
        %s226 = sadd.s32 %s224, %s225
        %s227 = smul.addr %s226, 2
        %s228 = scalar_lea.vmem %s3, %s227
        %v229 = vld [vmem:[%s220] sm:$0x3]
        %s230 = scalar_lea.vmem %s220, 2
        %v231 = vld [vmem:[%s230] sm:$0x3]
        %s232 = scalar_lea.vmem %s220, 4
        %v233 = vld [vmem:[%s232] sm:$0x3]
        %s234 = scalar_lea.vmem %s220, 6
        %v235 = vld [vmem:[%s234] sm:$0x3]
        %s236 = sld [smem:[#allocation2]]
        %v237 = vstv %s236
        %v238 = vmul.f32 %v229, %v237
        %s239 = sld [smem:[#allocation4]]
        %v240 = vstv %s239
        %v241 = vadd.f32 %v238, %v240
        %s242 = sld [smem:[#allocation2 + $0x1]]
        %v243 = vstv %s242
        %v244 = vmul.f32 %v231, %v243
        %v245 = vadd.f32 %v241, %v244
        %s246 = sld [smem:[#allocation2 + $0x2]]
        %v247 = vstv %s246
        %v248 = vmul.f32 %v233, %v247
        %v249 = vadd.f32 %v245, %v248
        %s250 = sld [smem:[#allocation2 + $0x3]]
        %v251 = vstv %s250
        %v252 = vmul.f32 %v235, %v251
        %v253 = vadd.f32 %v249, %v252
        %254 = vst [vmem:[%s228] sm:$0x3] %v253
        %s255 = sld [smem:[#allocation2 + $0x80]]
        %v256 = vstv %s255
        %v257 = vmul.f32 %v229, %v256
        %s258 = sld [smem:[#allocation4 + $0x1]]
        %v259 = vstv %s258
        %v260 = vadd.f32 %v257, %v259
        %s261 = sld [smem:[#allocation2 + $0x81]]
        %v262 = vstv %s261
        %v263 = vmul.f32 %v231, %v262
        %v264 = vadd.f32 %v260, %v263
        %s265 = sld [smem:[#allocation2 + $0x82]]
        %v266 = vstv %s265
        %v267 = vmul.f32 %v233, %v266
        %v268 = vadd.f32 %v264, %v267
        %s269 = sld [smem:[#allocation2 + $0x83]]
        %v270 = vstv %s269
        %v271 = vmul.f32 %v235, %v270
        %v272 = vadd.f32 %v268, %v271
        %s273 = scalar_lea.vmem %s228, 2
        %274 = vst [vmem:[%s273] sm:$0x3] %v272
        %s275 = sld [smem:[#allocation2 + $0x100]]
        %v276 = vstv %s275
        %v277 = vmul.f32 %v229, %v276
        %s278 = sld [smem:[#allocation4 + $0x2]]
        %v279 = vstv %s278
        %v280 = vadd.f32 %v277, %v279
        %s281 = sld [smem:[#allocation2 + $0x101]]
        %v282 = vstv %s281
        %v283 = vmul.f32 %v231, %v282
        %v284 = vadd.f32 %v280, %v283
        %s285 = sld [smem:[#allocation2 + $0x102]]
        %v286 = vstv %s285
        %v287 = vmul.f32 %v233, %v286
        %v288 = vadd.f32 %v284, %v287
        %s289 = sld [smem:[#allocation2 + $0x103]]
        %v290 = vstv %s289
        %v291 = vmul.f32 %v235, %v290
        %v292 = vadd.f32 %v288, %v291
        %s293 = scalar_lea.vmem %s228, 4
        %294 = vst [vmem:[%s293] sm:$0x3] %v292
        %p295 = scmp.lt.s32.totalorder %s20, 1
        %s296 = scalar_select %p295, %s20, 1
        %p297 = scmp.lt.s32.totalorder %s21, 0
        %s298 = scalar_select %p297, %s21, 0
        %s299 = smul.addr %s296, 3
        %s300 = sadd.s32 %s298, %s299
        %s301 = smul.addr %s300, 2
        %s302 = scalar_lea.vmem %s3, %s301
        // Predicated region
        $region41: #{filter_seg_model.3} parent=31 // pred_check
          %p303 = pneg %p118
        $region42: #{filter_seg_model.3} parent=31 // pred_check_branch
          %305 = sbr.rel (%p303) target = $region44
        $region43: #{filter_seg_model.3} parent=31 // pred_region
          _
        $region44: #{filter_seg_model.3} parent=31 // pred_fallthru
          _
      $region32: #{filter_seg_model.3} parent=5 // pred_fallthru
        _
      %p306 = scmp.le.s32.totalorder 2, %s11
      // Predicated region
      $region45: #{filter_seg_model.3} parent=5 // pred_check
        %p307 = pneg %p306
      $region46: #{filter_seg_model.3} parent=5 // pred_check_branch
        %309 = sbr.rel (%p307) target = $region48
      $region47: #{filter_seg_model.3} parent=5 // pred_region
        %s310 = ssub.s32 %s11, 2
        // Predicated region
        $region49: #{filter_seg_model.3} parent=47 // pred_check
          %p311 = pneg %p124
        $region50: #{filter_seg_model.3} parent=47 // pred_check_branch
          %313 = sbr.rel (%p311) target = $region52
        $region51: #{filter_seg_model.3} parent=47 // pred_region
          %p314 = scmp.lt.s32.totalorder %s22, 1
          %s315 = scalar_select %p314, %s22, 1
          %p316 = scmp.lt.s32.totalorder %s23, 0
          %s317 = scalar_select %p316, %s23, 0
          %s318 = smul.addr %s315, 3
          %s319 = sadd.s32 %s317, %s318
          %s320 = smul.addr %s319, 2
          %s321 = scalar_lea.vmem %s3, %s320
        $region52: #{filter_seg_model.3} parent=47 // pred_fallthru
          _
      $region48: #{filter_seg_model.3} parent=5 // pred_fallthru
        _
    $region6: #{filter_seg_model.3} parent=1 // loop_footer
      %s15 = sadd.s32 1, %s11
    $region7: #{filter_seg_model.3} parent=1 // loop_footer_branch
      %10 = sbr.rel target = $region3
    $region8: #{filter_seg_model.3} parent=1 // loop_exit
      _
    %322 = vsyncpa [#allocation3], 1
    %s323 = scalar_lea.sflag [#allocation3], 1
    %324 = vsyncpa %s323, 1
    %325 = vsyncpa [#allocation5], 1

</llo_original>
